<compile_context>
chip_gen: v7x
topology: tpu7x:2x2x1
jax: 0.10.0
libtpu: 0.0.40
codegen_flags: <defaults>
</compile_context>

<pallas_src>
import functools

import jax
import jax.numpy as jnp
from jax.experimental import pallas as pl
from jax.experimental.pallas import tpu as pltpu


def _round_up(x, m):
    return (x + m - 1) // m * m


def _mlp_kernel(x_ref, w1_ref, b1_ref, w2_ref, b2_ref, w3_ref, b3_ref, o_ref):
    # fc_1 + ReLU: h1[f, b] = sum_d w1[f, d] * x[b, d]  (= (x @ W1^T)^T, batch on lanes)
    h1 = jax.lax.dot_general(
        w1_ref[...], x_ref[...],
        dimension_numbers=(((1,), (1,)), ((), ())),
        preferred_element_type=jnp.float32)                               # (80, blk)
    h1 = jnp.maximum(h1 + b1_ref[...], 0.0)
    # dropout(p=0.3) is identity in eval mode.
    # TODO(synk): training-mode dropout (pltpu.prng_random_bits mask) not implemented.

    # fc_2 + ReLU
    h2 = jnp.dot(w2_ref[...], h1, preferred_element_type=jnp.float32)     # (10, blk)
    h2 = jnp.maximum(h2 + b2_ref[...], 0.0)

    # fc_3 (10 -> 1) as VPU broadcast-mul + sublane reduce: keeps the result lane-dense
    # and avoids an N=1 MXU matmul (which would force lane-sparse masked stores).
    out = jnp.sum(h2 * w3_ref[...], axis=0, keepdims=True) + b3_ref[...]  # (1, blk)
    o_ref[...] = out.astype(o_ref.dtype)


@functools.partial(jax.jit, static_argnames=("block_b",))
def mlp_forward(x, w1, b1, w2, b2, w3, b3, *, block_b=1024):
    """x: [B, dim] f32. Returns [B] f32 (matches PyTorch .squeeze(dim=1))."""
    B, dim = x.shape
    d1 = w1.shape[0]   # 80
    d2 = w2.shape[0]   # 10

    # Large batch tile (amortize per-step overhead), kept a multiple of 128 so the
    # lane-dense output block stays aligned; clamp for small batches.
    blk = min(block_b, _round_up(B, 128))
    blk = _round_up(blk, 128)
    B_pad = _round_up(B, blk)
    if B_pad != B:
        x = jnp.pad(x, ((0, B_pad - B), (0, 0)))
    num_blocks = B_pad // blk

    out = pl.pallas_call(
        _mlp_kernel,
        out_shape=jax.ShapeDtypeStruct((1, B_pad), jnp.float32),
        grid_spec=pltpu.PrefetchScalarGridSpec(
            num_scalar_prefetch=0,
            grid=(num_blocks,),
            in_specs=[
                pl.BlockSpec((blk, dim), lambda i: (i, 0)),  # x tile (streams from HBM)
                pl.BlockSpec((d1, dim), lambda i: (0, 0)),   # w1 (resident)
                pl.BlockSpec((d1, 1), lambda i: (0, 0)),     # b1
                pl.BlockSpec((d2, d1), lambda i: (0, 0)),    # w2
                pl.BlockSpec((d2, 1), lambda i: (0, 0)),     # b2
                pl.BlockSpec((d2, 1), lambda i: (0, 0)),     # w3 (fc_3.weight.T)
                pl.BlockSpec((1, 1), lambda i: (0, 0)),      # b3
            ],
            out_specs=pl.BlockSpec((1, blk), lambda i: (0, i)),  # lane-dense output row
        ),
        compiler_params=pltpu.CompilerParams(
            dimension_semantics=("parallel",),
        ),
    )(x, w1, b1, w2, b2, w3, b3)

    return out[0, :B]  # squeeze(dim=1) + drop batch padding


def init_params(key, dim):
    """Deterministic init matching the PyTorch module's shapes (weights (out, in))."""
    ks = jax.random.split(key, 6)

    def linear(kw, kb, fan_in, fan_out):
        bound = 1.0 / jnp.sqrt(fan_in)
        w = jax.random.uniform(kw, (fan_out, fan_in), jnp.float32, -bound, bound)
        b = jax.random.uniform(kb, (fan_out, 1), jnp.float32, -bound, bound)
        return w, b

    w1, b1 = linear(ks[0], ks[1], dim, 80)
    w2, b2 = linear(ks[2], ks[3], 80, 10)
    w3t, b3 = linear(ks[4], ks[5], 10, 1)   # w3t: (1, 10)
    return w1, b1, w2, b2, w3t.T, b3        # pass w3 as a (10, 1) column


def mlp_reference(x, w1, b1, w2, b2, w3, b3):
    h = jnp.maximum(x @ w1.T + b1[:, 0], 0.0)
    h = jnp.maximum(h @ w2.T + b2[:, 0], 0.0)
    return (h @ w3)[:, 0] + b3[0, 0]


if __name__ == "__main__":
    key = jax.random.PRNGKey(0)
    k_x, k_x2, k_p = jax.random.split(key, 3)

    dim = 32
    params = init_params(k_p, dim)

    # Small primary check (single block, padded batch tail).
    B = 8
    x = jax.random.normal(k_x, (B, dim), jnp.float32)
    y = jax.block_until_ready(mlp_forward(x, *params))
    y_ref = mlp_reference(x, *params)
    assert y.shape == (B,), y.shape
    assert jnp.allclose(y, y_ref, atol=1e-4, rtol=1e-4), (y, y_ref)

    # Exercise multi-block grid + ragged batch tail with a small forced tile.
    B2 = 200
    x2 = jax.random.normal(k_x2, (B2, dim), jnp.float32)
    y2 = jax.block_until_ready(mlp_forward(x2, *params, block_b=128))
    y2_ref = mlp_reference(x2, *params)
    assert y2.shape == (B2,), y2.shape
    assert jnp.allclose(y2, y2_ref, atol=1e-4, rtol=1e-4), (y2, y2_ref)

    print("KERNEL_OK")
</pallas_src>

<mosaic_0001>
module attributes {stable_mosaic.version = 11 : i64} {
  func.func @_mlp_kernel(%arg0: i32, %arg1: memref<128x32xf32, #tpu.memory_space<vmem>>, %arg2: memref<80x32xf32, #tpu.memory_space<vmem>>, %arg3: memref<80x1xf32, #tpu.memory_space<vmem>>, %arg4: memref<10x80xf32, #tpu.memory_space<vmem>>, %arg5: memref<10x1xf32, #tpu.memory_space<vmem>>, %arg6: memref<10x1xf32, #tpu.memory_space<vmem>>, %arg7: memref<1x1xf32, #tpu.memory_space<vmem>>, %arg8: memref<1x128xf32, #tpu.memory_space<vmem>>) attributes {dimension_semantics = [#tpu.dimension_semantics<parallel>], iteration_bounds = array<i64: 1>, scalar_prefetch = 0 : i64, scratch_operands = 0 : i64, tpu.core_type = #tpu.core_type<tc>, window_params = [{transform_indices = @transform_0, window_bounds = array<i64: 128, 32>}, {pipeline_mode = #tpu.pipeline_mode<synchronous>, transform_indices = @transform_1, window_bounds = array<i64: 80, 32>}, {pipeline_mode = #tpu.pipeline_mode<synchronous>, transform_indices = @transform_2, window_bounds = array<i64: 80, 1>}, {pipeline_mode = #tpu.pipeline_mode<synchronous>, transform_indices = @transform_3, window_bounds = array<i64: 10, 80>}, {pipeline_mode = #tpu.pipeline_mode<synchronous>, transform_indices = @transform_4, window_bounds = array<i64: 10, 1>}, {pipeline_mode = #tpu.pipeline_mode<synchronous>, transform_indices = @transform_5, window_bounds = array<i64: 10, 1>}, {pipeline_mode = #tpu.pipeline_mode<synchronous>, transform_indices = @transform_6, window_bounds = array<i64: 1, 1>}, {transform_indices = @transform_7, window_bounds = array<i64: 1, 128>}]} {
    %c0 = arith.constant 0 : index
    %c0_0 = arith.constant 0 : index
    %0 = vector.load %arg2[%c0, %c0_0] : memref<80x32xf32, #tpu.memory_space<vmem>>, vector<80x32xf32>
    %c0_1 = arith.constant 0 : index
    %c0_2 = arith.constant 0 : index
    %1 = vector.load %arg1[%c0_1, %c0_2] : memref<128x32xf32, #tpu.memory_space<vmem>>, vector<128x32xf32>
    %cst = arith.constant dense<0.000000e+00> : vector<80x128xf32>
    %2 = tpu.matmul %0, %1, %cst {dimension_numbers = #tpu.dot_dimension_numbers<[1], [1], [0], [0], [0, 0, 1, 0], [], []>} : vector<80x32xf32>, vector<128x32xf32>, vector<80x128xf32> -> vector<80x128xf32>
    %c0_3 = arith.constant 0 : index
    %c0_4 = arith.constant 0 : index
    %3 = vector.load %arg3[%c0_3, %c0_4] : memref<80x1xf32, #tpu.memory_space<vmem>>, vector<80x1xf32>
    %4 = vector.broadcast %3 : vector<80x1xf32> to vector<80x128xf32>
    %5 = arith.addf %2, %4 : vector<80x128xf32>
    %cst_5 = arith.constant 0.000000e+00 : f32
    %6 = vector.broadcast %cst_5 : f32 to vector<80x128xf32>
    %7 = arith.maximumf %5, %6 : vector<80x128xf32>
    %c0_6 = arith.constant 0 : index
    %c0_7 = arith.constant 0 : index
    %8 = vector.load %arg4[%c0_6, %c0_7] : memref<10x80xf32, #tpu.memory_space<vmem>>, vector<10x80xf32>
    %cst_8 = arith.constant dense<0.000000e+00> : vector<10x128xf32>
    %9 = tpu.matmul %8, %7, %cst_8 {dimension_numbers = #tpu.dot_dimension_numbers<[1], [0], [0], [1], [0, 0, 1, 1], [], []>} : vector<10x80xf32>, vector<80x128xf32>, vector<10x128xf32> -> vector<10x128xf32>
    %c0_9 = arith.constant 0 : index
    %c0_10 = arith.constant 0 : index
    %10 = vector.load %arg5[%c0_9, %c0_10] : memref<10x1xf32, #tpu.memory_space<vmem>>, vector<10x1xf32>
    %11 = vector.broadcast %10 : vector<10x1xf32> to vector<10x128xf32>
    %12 = arith.addf %9, %11 : vector<10x128xf32>
    %cst_11 = arith.constant 0.000000e+00 : f32
    %13 = vector.broadcast %cst_11 : f32 to vector<10x128xf32>
    %14 = arith.maximumf %12, %13 : vector<10x128xf32>
    %c0_12 = arith.constant 0 : index
    %c0_13 = arith.constant 0 : index
    %15 = vector.load %arg6[%c0_12, %c0_13] : memref<10x1xf32, #tpu.memory_space<vmem>>, vector<10x1xf32>
    %16 = vector.broadcast %15 : vector<10x1xf32> to vector<10x128xf32>
    %17 = arith.mulf %14, %16 : vector<10x128xf32>
    %cst_14 = arith.constant dense<0.000000e+00> : vector<128xf32>
    %18 = vector.multi_reduction <add>, %17, %cst_14 [0] : vector<10x128xf32> to vector<128xf32>
    %19 = vector.shape_cast %18 : vector<128xf32> to vector<1x128xf32>
    %c0_15 = arith.constant 0 : index
    %c0_16 = arith.constant 0 : index
    %20 = vector.load %arg7[%c0_15, %c0_16] : memref<1x1xf32, #tpu.memory_space<vmem>>, vector<1x1xf32>
    %21 = vector.broadcast %20 : vector<1x1xf32> to vector<1x128xf32>
    %22 = arith.addf %19, %21 : vector<1x128xf32>
    %c0_17 = arith.constant 0 : index
    %c0_18 = arith.constant 0 : index
    %23 = vector.load %arg8[%c0_17, %c0_18] : memref<1x128xf32, #tpu.memory_space<vmem>>, vector<1x128xf32>
    tpu.vector_store %arg8[%c0_17, %c0_18], %22 {strides = array<i32>} : memref<1x128xf32, #tpu.memory_space<vmem>>, vector<1x128xf32>,
    return
  }
  func.func @transform_0(%arg0: i32) -> (i32, i32) {
    %c0_i32 = arith.constant 0 : i32
    %c0_i32_0 = arith.constant 0 : i32
    return %arg0, %c0_i32 : i32, i32
  }
  func.func @transform_1(%arg0: i32) -> (i32, i32) {
    %c0_i32 = arith.constant 0 : i32
    %c0_i32_0 = arith.constant 0 : i32
    %c0_i32_1 = arith.constant 0 : i32
    return %c0_i32, %c0_i32_0 : i32, i32
  }
  func.func @transform_2(%arg0: i32) -> (i32, i32) {
    %c0_i32 = arith.constant 0 : i32
    %c0_i32_0 = arith.constant 0 : i32
    %c0_i32_1 = arith.constant 0 : i32
    return %c0_i32, %c0_i32_0 : i32, i32
  }
  func.func @transform_3(%arg0: i32) -> (i32, i32) {
    %c0_i32 = arith.constant 0 : i32
    %c0_i32_0 = arith.constant 0 : i32
    %c0_i32_1 = arith.constant 0 : i32
    return %c0_i32, %c0_i32_0 : i32, i32
  }
  func.func @transform_4(%arg0: i32) -> (i32, i32) {
    %c0_i32 = arith.constant 0 : i32
    %c0_i32_0 = arith.constant 0 : i32
    %c0_i32_1 = arith.constant 0 : i32
    return %c0_i32, %c0_i32_0 : i32, i32
  }
  func.func @transform_5(%arg0: i32) -> (i32, i32) {
    %c0_i32 = arith.constant 0 : i32
    %c0_i32_0 = arith.constant 0 : i32
    %c0_i32_1 = arith.constant 0 : i32
    return %c0_i32, %c0_i32_0 : i32, i32
  }
  func.func @transform_6(%arg0: i32) -> (i32, i32) {
    %c0_i32 = arith.constant 0 : i32
    %c0_i32_0 = arith.constant 0 : i32
    %c0_i32_1 = arith.constant 0 : i32
    return %c0_i32, %c0_i32_0 : i32, i32
  }
  func.func @transform_7(%arg0: i32) -> (i32, i32) {
    %c0_i32 = arith.constant 0 : i32
    %c0_i32_0 = arith.constant 0 : i32
    return %c0_i32, %arg0 : i32, i32
  }
}

</mosaic_0001>

<llo_original>
// kernel: mlp_forward.1
$region0: #{mlp_forward.1}
  #allocation0 [shape = 'u32[]', space=smem, size = 0x4, offset = 0x4, fixed_abs, tag = 'smem constant byte address 0x4 - core index']
  #allocation1 [shape = 'u32[144,128]{1,0:T(1,128)}', space=vmem, size = 0x12000, scoped, tag = 'internal scratch']
  #allocation2 [shape = 'f32[1,1]{1,0:T(1,128)S(1)}', space=vmem, size = 0x200, scoped, tag = 'scoped memory for mlp_forward.1']
  %s0 = inlined_call_operand.vmem [shape: f32[128,32], index: 0, kind: input, shape index: {}]
  %s1 = inlined_call_operand.vmem [shape: f32[80,32], index: 1, kind: input, shape index: {}]
  %s2 = inlined_call_operand.vmem [shape: f32[80,1], index: 2, kind: input, shape index: {}]
  %s3 = inlined_call_operand.vmem [shape: f32[10,80], index: 3, kind: input, shape index: {}]
  %s4 = inlined_call_operand.vmem [shape: f32[10,1], index: 4, kind: input, shape index: {}]
  %s5 = inlined_call_operand.vmem [shape: f32[10,1], index: 5, kind: input, shape index: {}]
  %s6 = inlined_call_operand.<no memory space> [shape: f32[1,1], index: 6, kind: input, shape index: {}]
  %s7 = inlined_call_operand.vmem [shape: f32[1,128], index: 7, kind: output, shape index: {}]
  %s8 = sld [smem:[#allocation0]]
  $region38: #{mlp_forward.1} parent=0
    _
  %s10 = ssub.s32 1, %s8
  %s11 = scalar_select 0, %s10, %s8
  %v12 = vstv %s6
  %13 = vst [vmem:[#allocation2] sm:$0x1] %v12
  // Predicated region
  $region2: #{mlp_forward.1} parent=0 // pred_check
    _
  $region3: #{mlp_forward.1} parent=0 // pred_check_branch
    %15 = sbr.rel (0) target = $region5
  $region4: #{mlp_forward.1} parent=0 // pred_region
    _
  $region5: #{mlp_forward.1} parent=0 // pred_fallthru
    _
  // Predicated region
  $region6: #{mlp_forward.1} parent=0 // pred_check
    _
  $region7: #{mlp_forward.1} parent=0 // pred_check_branch
    %17 = sbr.rel (0) target = $region9
  $region8: #{mlp_forward.1} parent=0 // pred_region
    _
  $region9: #{mlp_forward.1} parent=0 // pred_fallthru
    _
  // Predicated region
  $region10: #{mlp_forward.1} parent=0 // pred_check
    _
  $region11: #{mlp_forward.1} parent=0 // pred_check_branch
    %19 = sbr.rel (0) target = $region13
  $region12: #{mlp_forward.1} parent=0 // pred_region
    _
  $region13: #{mlp_forward.1} parent=0 // pred_fallthru
    _
  // Predicated region
  $region14: #{mlp_forward.1} parent=0 // pred_check
    _
  $region15: #{mlp_forward.1} parent=0 // pred_check_branch
    %21 = sbr.rel (0) target = $region17
  $region16: #{mlp_forward.1} parent=0 // pred_region
    _
  $region17: #{mlp_forward.1} parent=0 // pred_fallthru
    _
  // Predicated region
  $region18: #{mlp_forward.1} parent=0 // pred_check
    _
  $region19: #{mlp_forward.1} parent=0 // pred_check_branch
    %23 = sbr.rel (0) target = $region21
  $region20: #{mlp_forward.1} parent=0 // pred_region
    _
  $region21: #{mlp_forward.1} parent=0 // pred_fallthru
    _
  // Predicated region
  $region22: #{mlp_forward.1} parent=0 // pred_check
    _
  $region23: #{mlp_forward.1} parent=0 // pred_check_branch
    %25 = sbr.rel (0) target = $region25
  $region24: #{mlp_forward.1} parent=0 // pred_region
    _
  $region25: #{mlp_forward.1} parent=0 // pred_fallthru
    _
  // Predicated region
  $region26: #{mlp_forward.1} parent=0 // pred_check
    _
  $region27: #{mlp_forward.1} parent=0 // pred_check_branch
    %27 = sbr.rel (0) target = $region29
  $region28: #{mlp_forward.1} parent=0 // pred_region
    _
  $region29: #{mlp_forward.1} parent=0 // pred_fallthru
    _
  %v28 = vld [vmem:[%s1] sm:$0xff]
  %v29 = vld [vmem:[%s1 + $0x8] sm:$0xff]
  %v30 = vld [vmem:[%s1 + $0x10] sm:$0xff]
  %v31 = vld [vmem:[%s1 + $0x18] sm:$0xff]
  %v32 = vld [vmem:[%s1 + $0x20] sm:$0xff]
  %v33 = vld [vmem:[%s1 + $0x28] sm:$0xff]
  %v34 = vld [vmem:[%s1 + $0x30] sm:$0xff]
  %v35 = vld [vmem:[%s1 + $0x38] sm:$0xff]
  %v36 = vld [vmem:[%s1 + $0x40] sm:$0xff]
  %v37 = vld [vmem:[%s1 + $0x48] sm:$0xff]
  %v38 = vld [vmem:[%s0] sm:$0xff]
  %v39 = vld [vmem:[%s0 + $0x8] sm:$0xff]
  %v40 = vld [vmem:[%s0 + $0x10] sm:$0xff]
  %v41 = vld [vmem:[%s0 + $0x18] sm:$0xff]
  %v42 = vld [vmem:[%s0 + $0x20] sm:$0xff]
  %v43 = vld [vmem:[%s0 + $0x28] sm:$0xff]
  %v44 = vld [vmem:[%s0 + $0x30] sm:$0xff]
  %v45 = vld [vmem:[%s0 + $0x38] sm:$0xff]
  %v46 = vld [vmem:[%s0 + $0x40] sm:$0xff]
  %v47 = vld [vmem:[%s0 + $0x48] sm:$0xff]
  %v48 = vld [vmem:[%s0 + $0x50] sm:$0xff]
  %v49 = vld [vmem:[%s0 + $0x58] sm:$0xff]
  %v50 = vld [vmem:[%s0 + $0x60] sm:$0xff]
  %v51 = vld [vmem:[%s0 + $0x68] sm:$0xff]
  %v52 = vld [vmem:[%s0 + $0x70] sm:$0xff]
  %v53 = vld [vmem:[%s0 + $0x78] sm:$0xff]
  %v54 = vld [vmem:[%s2] sm:$0xff]
  %v55 = vld [vmem:[%s2 + $0x8] sm:$0xff]
  %v56 = vld [vmem:[%s2 + $0x10] sm:$0xff]
  %v57 = vld [vmem:[%s2 + $0x18] sm:$0xff]
  %v58 = vld [vmem:[%s2 + $0x20] sm:$0xff]
  %v59 = vld [vmem:[%s2 + $0x28] sm:$0xff]
  %v60 = vld [vmem:[%s2 + $0x30] sm:$0xff]
  %v61 = vld [vmem:[%s2 + $0x38] sm:$0xff]
  %v62 = vld [vmem:[%s2 + $0x40] sm:$0xff]
  %v63 = vld [vmem:[%s2 + $0x48] sm:$0xff]
  %65 = vset.pattern.permute.xlu0 0
  %66 = vperm.xlu0 %65, %v54
  %v67 = vpop.permute.xlu0 %66
  %70 = vset.pattern.permute.xlu0 0
  %71 = vperm.xlu0 %70, %v55
  %v72 = vpop.permute.xlu0 %71
  %75 = vset.pattern.permute.xlu0 0
  %76 = vperm.xlu0 %75, %v56
  %v77 = vpop.permute.xlu0 %76
  %80 = vset.pattern.permute.xlu0 0
  %81 = vperm.xlu0 %80, %v57
  %v82 = vpop.permute.xlu0 %81
  %85 = vset.pattern.permute.xlu0 0
  %86 = vperm.xlu0 %85, %v58
  %v87 = vpop.permute.xlu0 %86
  %90 = vset.pattern.permute.xlu0 0
  %91 = vperm.xlu0 %90, %v59
  %v92 = vpop.permute.xlu0 %91
  %95 = vset.pattern.permute.xlu0 0
  %96 = vperm.xlu0 %95, %v60
  %v97 = vpop.permute.xlu0 %96
  %100 = vset.pattern.permute.xlu0 0
  %101 = vperm.xlu0 %100, %v61
  %v102 = vpop.permute.xlu0 %101
  %105 = vset.pattern.permute.xlu0 0
  %106 = vperm.xlu0 %105, %v62
  %v107 = vpop.permute.xlu0 %106
  %110 = vset.pattern.permute.xlu0 0
  %111 = vperm.xlu0 %110, %v63
  %v112 = vpop.permute.xlu0 %111
  %vm114 = vcmask 261120
  %v116 = vsel %vm114, %v28, 0
  %v119 = vsel %vm114, %v29, 0
  %v122 = vsel %vm114, %v30, 0
  %v125 = vsel %vm114, %v31, 0
  %v128 = vsel %vm114, %v32, 0
  %v131 = vsel %vm114, %v33, 0
  %v134 = vsel %vm114, %v34, 0
  %v137 = vsel %vm114, %v35, 0
  %v140 = vsel %vm114, %v36, 0
  %v143 = vsel %vm114, %v37, 0
  %v146 = vsel %vm114, %v38, 0
  %v149 = vsel %vm114, %v39, 0
  %v152 = vsel %vm114, %v40, 0
  %v155 = vsel %vm114, %v41, 0
  %v158 = vsel %vm114, %v42, 0
  %v161 = vsel %vm114, %v43, 0
  %v164 = vsel %vm114, %v44, 0
  %v167 = vsel %vm114, %v45, 0
  %v170 = vsel %vm114, %v46, 0
  %v173 = vsel %vm114, %v47, 0
  %v176 = vsel %vm114, %v48, 0
  %v179 = vsel %vm114, %v49, 0
  %v182 = vsel %vm114, %v50, 0
  %v185 = vsel %vm114, %v51, 0
  %v188 = vsel %vm114, %v52, 0
  %v191 = vsel %vm114, %v53, 0
  %193 = vmatprep.subr.mxu0 0.0
  %194 = vmatpush1.xpose.msra.mxu0 %v146
  %195 = vmatprep.subr.mxu0 0.0
  %196 = vmatpush1.xpose.msra.mxu0 %v149
  %197 = vmatprep.subr.mxu0 0.0
  %198 = vmatpush1.xpose.msra.mxu0 %v152
  %199 = vmatprep.subr.mxu0 0.0
  %200 = vmatpush1.xpose.msra.mxu0 %v155
  %201 = vmatprep.subr.mxu0 0.0
  %202 = vmatpush1.xpose.msra.mxu0 %v158
  %203 = vmatprep.subr.mxu0 0.0
  %204 = vmatpush1.xpose.msra.mxu0 %v161
  %205 = vmatprep.subr.mxu0 0.0
  %206 = vmatpush1.xpose.msra.mxu0 %v164
  %207 = vmatprep.subr.mxu0 0.0
  %208 = vmatpush1.xpose.msra.mxu0 %v167
  %209 = vmatprep.subr.mxu0 0.0
  %210 = vmatpush1.xpose.msra.mxu0 %v170
  %211 = vmatprep.subr.mxu0 0.0
  %212 = vmatpush1.xpose.msra.mxu0 %v173
  %213 = vmatprep.subr.mxu0 0.0
  %214 = vmatpush1.xpose.msra.mxu0 %v176
  %215 = vmatprep.subr.mxu0 0.0
  %216 = vmatpush1.xpose.msra.mxu0 %v179
  %217 = vmatprep.subr.mxu0 0.0
  %218 = vmatpush1.xpose.msra.mxu0 %v182
  %219 = vmatprep.subr.mxu0 0.0
  %220 = vmatpush1.xpose.msra.mxu0 %v185
  %221 = vmatprep.subr.mxu0 0.0
  %222 = vmatpush1.xpose.msra.mxu0 %v188
  %223 = vmatprep.subr.mxu0 0.0
  %224 = vmatpush1.xpose.msra.mxu0 %v191
  %225 = vmatprep.subr.mxu0 0.0
  %226 = vmatpush1.xpose.msra.mxu0 0.0
  %227 = vmatprep.subr.mxu0 0.0
  %228 = vmatpush1.xpose.msra.mxu0 0.0
  %229 = vmatprep.subr.mxu0 0.0
  %230 = vmatpush1.xpose.msra.mxu0 0.0
  %231 = vmatprep.subr.mxu0 0.0
  %232 = vmatpush1.xpose.msra.mxu0 0.0
  %233 = vmatprep.subr.mxu0 0.0
  %234 = vmatpush1.xpose.msra.mxu0 0.0
  %235 = vmatprep.subr.mxu0 0.0
  %236 = vmatpush1.xpose.msra.mxu0 0.0
  %237 = vmatprep.subr.mxu0 0.0
  %238 = vmatpush1.xpose.msra.mxu0 0.0
  %239 = vmatprep.subr.mxu0 0.0
  %240 = vmatpush1.xpose.msra.mxu0 0.0
  %241 = vmatprep.subr.mxu0 0.0
  %242 = vmatpush1.xpose.msra.mxu0 0.0
  %243 = vmatprep.subr.mxu0 0.0
  %244 = vmatpush1.xpose.msra.mxu0 0.0
  %245 = vmatprep.subr.mxu0 0.0
  %246 = vmatpush1.xpose.msra.mxu0 0.0
  %247 = vmatprep.subr.mxu0 0.0
  %248 = vmatpush1.xpose.msra.mxu0 0.0
  %249 = vmatprep.subr.mxu0 0.0
  %250 = vmatpush1.xpose.msra.mxu0 0.0
  %251 = vmatprep.subr.mxu0 0.0
  %252 = vmatpush1.xpose.msra.mxu0 0.0
  %253 = vmatprep.subr.mxu0 0.0
  %254 = vmatpush1.xpose.msra.mxu0 0.0
  %255 = vmatprep.subr.mxu0 0.0
  %256 = vmatpush1.xpose.msra.mxu0 0.0
  %257 = vmatprep.mubr.f32.mxu0 0.0
  %258 = vmatmul.mubr.f32.gmra.mrb[0].mxu0 %v116
  %v259 = vpop.f32.mrb[0].mxu0
  %v260 = vadd.f32 %v67, %v259
  %v261 = vpop.f32.mrb[0].mxu0
  %262 = vmatprep.mubr.f32.mxu0 0.0
  %263 = vmatmul.mubr.f32.gmra.mrb[0].mxu0 %v119
  %v264 = vpop.f32.mrb[0].mxu0
  %v265 = vadd.f32 %v72, %v264
  %v266 = vpop.f32.mrb[0].mxu0
  %267 = vmatprep.mubr.f32.mxu0 0.0
  %268 = vmatmul.mubr.f32.gmra.mrb[0].mxu0 %v122
  %v269 = vpop.f32.mrb[0].mxu0
  %v270 = vadd.f32 %v77, %v269
  %v271 = vpop.f32.mrb[0].mxu0
  %272 = vmatprep.mubr.f32.mxu0 0.0
  %273 = vmatmul.mubr.f32.gmra.mrb[0].mxu0 %v125
  %v274 = vpop.f32.mrb[0].mxu0
  %v275 = vadd.f32 %v82, %v274
  %v276 = vpop.f32.mrb[0].mxu0
  %277 = vmatprep.mubr.f32.mxu0 0.0
  %278 = vmatmul.mubr.f32.gmra.mrb[0].mxu0 %v128
  %v279 = vpop.f32.mrb[0].mxu0
  %v280 = vadd.f32 %v87, %v279
  %v281 = vpop.f32.mrb[0].mxu0
  %282 = vmatprep.mubr.f32.mxu0 0.0
  %283 = vmatmul.mubr.f32.gmra.mrb[0].mxu0 %v131
  %v284 = vpop.f32.mrb[0].mxu0
  %v285 = vadd.f32 %v92, %v284
  %v286 = vpop.f32.mrb[0].mxu0
  %287 = vmatprep.mubr.f32.mxu0 0.0
  %288 = vmatmul.mubr.f32.gmra.mrb[0].mxu0 %v134
  %v289 = vpop.f32.mrb[0].mxu0
  %v290 = vadd.f32 %v97, %v289
  %v291 = vpop.f32.mrb[0].mxu0
  %292 = vmatprep.mubr.f32.mxu0 0.0
  %293 = vmatmul.mubr.f32.gmra.mrb[0].mxu0 %v137
  %v294 = vpop.f32.mrb[0].mxu0
  %v295 = vadd.f32 %v102, %v294
  %v296 = vpop.f32.mrb[0].mxu0
  %297 = vmatprep.mubr.f32.mxu0 0.0
  %298 = vmatmul.mubr.f32.gmra.mrb[0].mxu0 %v140
  %v299 = vpop.f32.mrb[0].mxu0
  %v300 = vadd.f32 %v107, %v299
  %v301 = vpop.f32.mrb[0].mxu0
  %302 = vmatprep.mubr.f32.mxu0 0.0
  %303 = vmatmul.mubr.f32.gmra.mrb[0].mxu0 %v143
  %v304 = vpop.f32.mrb[0].mxu0
  %v305 = vadd.f32 %v112, %v304
  %v306 = vpop.f32.mrb[0].mxu0
  %307 = vdwg.mxu0
  %v308 = vmax.f32 %v260, 0.0
  %v309 = vmax.f32 %v265, 0.0
  %v310 = vmax.f32 %v270, 0.0
  %v311 = vmax.f32 %v275, 0.0
  %v312 = vmax.f32 %v280, 0.0
  %v313 = vmax.f32 %v285, 0.0
  %v314 = vmax.f32 %v290, 0.0
  %v315 = vmax.f32 %v295, 0.0
  %v316 = vmax.f32 %v300, 0.0
  %v317 = vmax.f32 %v305, 0.0
  %v318 = vld [vmem:[%s3] sm:$0xff]
  %v319 = vld [vmem:[%s3 + $0x8] sm:$0x3]
  %v320 = vld [vmem:[%s4] sm:$0xff]
  %v321 = vld [vmem:[%s4 + $0x8] sm:$0x3]
  %323 = vset.pattern.permute.xlu0 0
  %324 = vperm.xlu0 %323, %v320
  %v325 = vpop.permute.xlu0 %324
  %328 = vset.pattern.permute.xlu0 0
  %329 = vperm.xlu0 %328, %v321
  %v330 = vpop.permute.xlu0 %329
  %vm332 = vcmask 654336
  %v334 = vsel %vm332, %v318, 0
  %v337 = vsel %vm332, %v319, 0
  %339 = vmatprep.subr.mxu0 0.0
  %340 = vmatpush1.msra.mxu0 %v308
  %341 = vmatprep.subr.mxu0 0.0
  %342 = vmatpush1.msra.mxu0 %v309
  %343 = vmatprep.subr.mxu0 0.0
  %344 = vmatpush1.msra.mxu0 %v310
  %345 = vmatprep.subr.mxu0 0.0
  %346 = vmatpush1.msra.mxu0 %v311
  %347 = vmatprep.subr.mxu0 0.0
  %348 = vmatpush1.msra.mxu0 %v312
  %349 = vmatprep.subr.mxu0 0.0
  %350 = vmatpush1.msra.mxu0 %v313
  %351 = vmatprep.subr.mxu0 0.0
  %352 = vmatpush1.msra.mxu0 %v314
  %353 = vmatprep.subr.mxu0 0.0
  %354 = vmatpush1.msra.mxu0 %v315
  %355 = vmatprep.subr.mxu0 0.0
  %356 = vmatpush1.msra.mxu0 %v316
  %357 = vmatprep.subr.mxu0 0.0
  %358 = vmatpush1.msra.mxu0 %v317
  %359 = vmatprep.subr.mxu0 0.0
  %360 = vmatpush1.msra.mxu0 0.0
  %361 = vmatprep.subr.mxu0 0.0
  %362 = vmatpush1.msra.mxu0 0.0
  %363 = vmatprep.subr.mxu0 0.0
  %364 = vmatpush1.msra.mxu0 0.0
  %365 = vmatprep.subr.mxu0 0.0
  %366 = vmatpush1.msra.mxu0 0.0
  %367 = vmatprep.subr.mxu0 0.0
  %368 = vmatpush1.msra.mxu0 0.0
  %369 = vmatprep.subr.mxu0 0.0
  %370 = vmatpush1.msra.mxu0 0.0
  %371 = vmatprep.subr.mxu0 0.0
  %372 = vmatpush1.msra.mxu0 0.0
  %373 = vmatprep.subr.mxu0 0.0
  %374 = vmatpush1.msra.mxu0 0.0
  %375 = vmatprep.subr.mxu0 0.0
  %376 = vmatpush1.msra.mxu0 0.0
  %377 = vmatprep.subr.mxu0 0.0
  %378 = vmatpush1.msra.mxu0 0.0
  %379 = vmatprep.subr.mxu0 0.0
  %380 = vmatpush1.msra.mxu0 0.0
  %381 = vmatprep.subr.mxu0 0.0
  %382 = vmatpush1.msra.mxu0 0.0
  %383 = vmatprep.subr.mxu0 0.0
  %384 = vmatpush1.msra.mxu0 0.0
  %385 = vmatprep.subr.mxu0 0.0
  %386 = vmatpush1.msra.mxu0 0.0
  %387 = vmatprep.subr.mxu0 0.0
  %388 = vmatpush1.msra.mxu0 0.0
  %389 = vmatprep.subr.mxu0 0.0
  %390 = vmatpush1.msra.mxu0 0.0
  %391 = vmatprep.subr.mxu0 0.0
  %392 = vmatpush1.msra.mxu0 0.0
  %393 = vmatprep.subr.mxu0 0.0
  %394 = vmatpush1.msra.mxu0 0.0
  %395 = vmatprep.subr.mxu0 0.0
  %396 = vmatpush1.msra.mxu0 0.0
  %397 = vmatprep.subr.mxu0 0.0
  %398 = vmatpush1.msra.mxu0 0.0
  %399 = vmatprep.subr.mxu0 0.0
  %400 = vmatpush1.msra.mxu0 0.0
  %401 = vmatprep.subr.mxu0 0.0
  %402 = vmatpush1.msra.mxu0 0.0
  %403 = vmatprep.mubr.f32.mxu0 0.0
  %404 = vmatmul.mubr.f32.gmra.mrb[0].mxu0 %v334
  %v405 = vpop.f32.mrb[0].mxu0
  %v406 = vadd.f32 %v325, %v405
  %v407 = vpop.f32.mrb[0].mxu0
  %408 = vmatprep.mubr.f32.mxu0 0.0
  %409 = vmatmul.mubr.f32.gmra.mrb[0].mxu0 %v337
  %v410 = vpop.f32.mrb[0].mxu0
  %v411 = vadd.f32 %v330, %v410
  %v412 = vpop.f32.mrb[0].mxu0
  %413 = vdwg.mxu0
  %v414 = vmax.f32 %v406, 0.0
  %v415 = vmax.f32 %v411, 0.0
  %v416 = vld [vmem:[%s5] sm:$0xff]
  %v417 = vld [vmem:[%s5 + $0x8] sm:$0x3]
  %419 = vset.pattern.permute.xlu0 0
  %420 = vperm.xlu0 %419, %v416
  %v421 = vpop.permute.xlu0 %420
  %424 = vset.pattern.permute.xlu0 0
  %425 = vperm.xlu0 %424, %v417
  %v426 = vpop.permute.xlu0 %425
  %v428 = vmul.f32 %v414, %v421
  %v429 = vmul.f32 %v415, %v426
  %vm430 = vcmask 1041408
  %v431 = vsel %vm430, %v429, 0.0
  %v432 = vadd.f32 %v428, %v431
  %v433 = vrot.slane %v432, 4
  %v434 = vadd.f32 %v432, %v433
  %v435 = vrot.slane %v434, 2
  %v436 = vadd.f32 %v434, %v435
  %v437 = vrot.slane %v436, 1
  %v438 = vadd.f32 %v436, %v437
  %v439 = vld [vmem:[#allocation2] sm:$0x1]
  %441 = vset.pattern.permute.xlu0 0
  %442 = vperm.xlu0 %441, %v439
  %v443 = vpop.permute.xlu0 %442
  %v445 = vlaneseq
  %v446 = vshrl.u32 %v445, 7
  %v447 = vsub.s32 0, %v446
  %v448 = vrot.slane %v443, %v447
  %v449 = vadd.f32 %v438, %v448
  %450 = vst [vmem:[%s7] sm:$0x1] %v449
  // Predicated region
  $region30: #{mlp_forward.1} parent=0 // pred_check
    _
  $region31: #{mlp_forward.1} parent=0 // pred_check_branch
    %452 = sbr.rel (0) target = $region33
  $region32: #{mlp_forward.1} parent=0 // pred_region
    _
  $region33: #{mlp_forward.1} parent=0 // pred_fallthru
    _
  // Predicated region
  $region34: #{mlp_forward.1} parent=0 // pred_check
    _
  $region35: #{mlp_forward.1} parent=0 // pred_check_branch
    %454 = sbr.rel (0) target = $region37
  $region36: #{mlp_forward.1} parent=0 // pred_region
    _
  $region37: #{mlp_forward.1} parent=0 // pred_fallthru
    _

</llo_original>
